<compile_context>
chip_gen: v5e
topology: v5e:2x2
jax: 0.10.0
libtpu: 0.0.40
codegen_flags: <defaults>
</compile_context>

<pallas_src>
import functools

import jax
import jax.numpy as jnp
from jax.experimental import pallas as pl
from jax.experimental.pallas import tpu as pltpu

HIDDEN = 128
LANES = 128


def _round_up(x, m):
    return ((x + m - 1) // m) * m


def _cdiv(a, b):
    return (a + b - 1) // b


def dqn_kernel(xT_ref, w1t_ref, bias_ref, w2t_ref, w3t_ref, out_ref, *, n_actions):
    """One batch-tile of the MLP in transposed (feature-major) layout.

    xT_ref   : [obs_pad, TB] f32   (rows >= n_obs are zero)
    w1t_ref  : [HIDDEN, obs_pad] bf16  (cols >= n_obs are zero)
    bias_ref : [HIDDEN, 8] f32     col 0 = b1, col 1 = b2, col 2 = b3 (padded)
    w2t_ref  : [HIDDEN, HIDDEN] bf16
    w3t_ref  : [a_pad, HIDDEN] bf16 (rows >= n_actions are zero)
    out_ref  : [n_actions, TB] f32
    """
    a_pad = w3t_ref.shape[0]

    xT = xT_ref[...].astype(jnp.bfloat16)                    # [obs_pad, TB]
    b1 = bias_ref[:, 0:1]                                    # [HIDDEN, 1]
    b2 = bias_ref[:, 1:2]                                    # [HIDDEN, 1]
    b3 = bias_ref[0:a_pad, 2:3]                              # [a_pad, 1]

    # Layer 1: bf16 operands, f32 accumulation on the MXU (K = obs_pad = 8).
    h1 = jnp.dot(w1t_ref[...], xT, preferred_element_type=jnp.float32) + b1
    h1 = jnp.maximum(h1, 0.0)                                # [HIDDEN, TB]

    # Layer 2.
    h2 = jnp.dot(w2t_ref[...], h1.astype(jnp.bfloat16),
                 preferred_element_type=jnp.float32) + b2
    h2 = jnp.maximum(h2, 0.0)                                # [HIDDEN, TB]

    # Layer 3: only a_pad (=8) output rows are computed; n_actions are stored.
    out = jnp.dot(w3t_ref[...], h2.astype(jnp.bfloat16),
                  preferred_element_type=jnp.float32) + b3   # [a_pad, TB]
    out_ref[...] = out[0:n_actions, :]                       # compact, lane-dense


def dqn_forward(x, packed, n_actions, *, max_block_b=4096):
    """Run the DQN forward pass. x: [B, n_obs] f32 -> [B, n_actions] f32."""
    w1t, bias, w2t, w3t = packed
    B, n_obs = x.shape
    obs_pad = w1t.shape[1]

    max_block_b = max(LANES, _round_up(max_block_b, LANES))
    b_lane = _round_up(B, LANES)                  # minimal lane-granular padding
    n_steps = _cdiv(b_lane, max_block_b)
    if b_lane >= 2 * LANES:
        # v7x megacore: at least 2 (and an even number of) grid steps.
        n_steps = max(2, n_steps)
        n_steps += n_steps % 2
    tb = _round_up(_cdiv(b_lane, n_steps), LANES)
    b_padded = tb * n_steps

    # Transposed, lane-dense input layout: [obs_pad, b_padded], zero padded.
    xT = jnp.zeros((obs_pad, b_padded), jnp.float32).at[:n_obs, :B].set(x.T)

    kernel = functools.partial(dqn_kernel, n_actions=n_actions)
    out_T = pl.pallas_call(
        kernel,
        out_shape=jax.ShapeDtypeStruct((n_actions, b_padded), jnp.float32),
        grid=(n_steps,),
        in_specs=[
            pl.BlockSpec((obs_pad, tb), lambda i: (0, i)),   # xT: tiled over batch
            pl.BlockSpec(w1t.shape, lambda i: (0, 0)),       # VMEM-resident weights
            pl.BlockSpec(bias.shape, lambda i: (0, 0)),
            pl.BlockSpec(w2t.shape, lambda i: (0, 0)),
            pl.BlockSpec(w3t.shape, lambda i: (0, 0)),
        ],
        out_specs=pl.BlockSpec((n_actions, tb), lambda i: (0, i)),
        compiler_params=pltpu.CompilerParams(
            dimension_semantics=("parallel",),               # both TCs on v7x
        ),
    )(xT, w1t, bias, w2t, w3t)

    return out_T[:, :B].T                                    # tiny [n_actions, B] -> [B, n_actions]


def init_params(key, n_observations, n_actions, hidden=HIDDEN):
    """Deterministic init mimicking nn.Linear: U(-1/sqrt(fan_in), +1/sqrt(fan_in)).

    Returns pre-packed / pre-cast parameters (done once, not per call):
      w1t  : bf16 [hidden, obs_pad]   (W1ᵀ, zero-padded columns >= n_obs)
      bias : f32  [hidden, 8]         col0 = b1, col1 = b2, col2 = b3 (padded)
      w2t  : bf16 [hidden, hidden]    (W2ᵀ)
      w3t  : bf16 [a_pad, hidden]     (W3ᵀ, zero-padded rows >= n_actions)
    """
    dims = [(n_observations, hidden), (hidden, hidden), (hidden, n_actions)]
    raw = []
    for fan_in, fan_out in dims:
        key, kw, kb = jax.random.split(key, 3)
        bound = 1.0 / float(fan_in) ** 0.5
        w = jax.random.uniform(kw, (fan_in, fan_out), jnp.float32, -bound, bound)
        b = jax.random.uniform(kb, (fan_out,), jnp.float32, -bound, bound)
        raw.append((w, b))
    (w1, b1), (w2, b2), (w3, b3) = raw

    obs_pad = max(8, _round_up(n_observations, 8))
    a_pad = max(8, _round_up(n_actions, 8))
    assert a_pad <= hidden, "n_actions too large for packed bias layout"

    w1t = (jnp.zeros((hidden, obs_pad), jnp.float32)
           .at[:, :n_observations].set(w1.T)).astype(jnp.bfloat16)
    w2t = w2.T.astype(jnp.bfloat16)
    w3t = (jnp.zeros((a_pad, hidden), jnp.float32)
           .at[:n_actions, :].set(w3.T)).astype(jnp.bfloat16)

    bias = jnp.zeros((hidden, 8), jnp.float32)
    bias = bias.at[:, 0].set(b1)
    bias = bias.at[:, 1].set(b2)
    bias = bias.at[:n_actions, 2].set(b3)
    return (w1t, bias, w2t, w3t)


def dqn_reference(x, packed, n_observations, n_actions):
    """Pure-JAX reference mirroring the kernel math (bf16 operands, f32 accum)."""
    w1t, bias, w2t, w3t = packed
    b1 = bias[:, 0]
    b2 = bias[:, 1]
    b3 = bias[:n_actions, 2]
    w1 = w1t[:, :n_observations].T           # [n_obs, hidden] bf16
    w2 = w2t.T                               # [hidden, hidden] bf16
    w3 = w3t[:n_actions, :].T                # [hidden, n_actions] bf16

    h1 = jax.nn.relu(jnp.dot(x.astype(jnp.bfloat16), w1,
                             preferred_element_type=jnp.float32) + b1)
    h2 = jax.nn.relu(jnp.dot(h1.astype(jnp.bfloat16), w2,
                             preferred_element_type=jnp.float32) + b2)
    out = jnp.dot(h2.astype(jnp.bfloat16), w3,
                  preferred_element_type=jnp.float32) + b3
    return out


if __name__ == "__main__":
    # CartPole-v1: n_observations = 4, n_actions = 2.
    n_observations, n_actions = 4, 2
    batch = 8

    key = jax.random.PRNGKey(0)
    key, kx = jax.random.split(key)
    x = jax.random.normal(kx, (batch, n_observations), jnp.float32)
    packed = init_params(key, n_observations, n_actions)

    out = jax.block_until_ready(dqn_forward(x, packed, n_actions))
    ref = dqn_reference(x, packed, n_observations, n_actions)

    assert out.shape == (batch, n_actions), out.shape
    assert jnp.allclose(out, ref, atol=1e-2, rtol=1e-2), "mismatch vs reference"
    print("KERNEL_OK")
</pallas_src>

<mosaic_0001>
module attributes {stable_mosaic.version = 11 : i64} {
  func.func @dqn_kernel(%arg0: i32, %arg1: memref<8x128xf32, #tpu.memory_space<vmem>>, %arg2: memref<128x8xbf16, #tpu.memory_space<vmem>>, %arg3: memref<128x8xf32, #tpu.memory_space<vmem>>, %arg4: memref<128x128xbf16, #tpu.memory_space<vmem>>, %arg5: memref<8x128xbf16, #tpu.memory_space<vmem>>, %arg6: memref<2x128xf32, #tpu.memory_space<vmem>>) attributes {dimension_semantics = [#tpu.dimension_semantics<parallel>], iteration_bounds = array<i64: 1>, scalar_prefetch = 0 : i64, scratch_operands = 0 : i64, tpu.core_type = #tpu.core_type<tc>, window_params = [{transform_indices = @transform_0, window_bounds = array<i64: 8, 128>}, {pipeline_mode = #tpu.pipeline_mode<synchronous>, transform_indices = @transform_1, window_bounds = array<i64: 128, 8>}, {pipeline_mode = #tpu.pipeline_mode<synchronous>, transform_indices = @transform_2, window_bounds = array<i64: 128, 8>}, {pipeline_mode = #tpu.pipeline_mode<synchronous>, transform_indices = @transform_3, window_bounds = array<i64: 128, 128>}, {pipeline_mode = #tpu.pipeline_mode<synchronous>, transform_indices = @transform_4, window_bounds = array<i64: 8, 128>}, {transform_indices = @transform_5, window_bounds = array<i64: 2, 128>}]} {
    %c0 = arith.constant 0 : index
    %c0_0 = arith.constant 0 : index
    %0 = vector.load %arg1[%c0, %c0_0] : memref<8x128xf32, #tpu.memory_space<vmem>>, vector<8x128xf32>
    %1 = arith.truncf %0 : vector<8x128xf32> to vector<8x128xbf16>
    %c0_1 = arith.constant 0 : index
    %c0_2 = arith.constant 0 : index
    %2 = vector.load %arg3[%c0_1, %c0_2] : memref<128x8xf32, #tpu.memory_space<vmem>>, vector<128x1xf32>
    %c0_3 = arith.constant 0 : index
    %c1 = arith.constant 1 : index
    %3 = vector.load %arg3[%c0_3, %c1] : memref<128x8xf32, #tpu.memory_space<vmem>>, vector<128x1xf32>
    %c0_4 = arith.constant 0 : index
    %c2 = arith.constant 2 : index
    %4 = vector.load %arg3[%c0_4, %c2] : memref<128x8xf32, #tpu.memory_space<vmem>>, vector<8x1xf32>
    %c0_5 = arith.constant 0 : index
    %c0_6 = arith.constant 0 : index
    %5 = vector.load %arg2[%c0_5, %c0_6] : memref<128x8xbf16, #tpu.memory_space<vmem>>, vector<128x8xbf16>
    %cst = arith.constant dense<0.000000e+00> : vector<128x128xf32>
    %6 = tpu.matmul %5, %1, %cst {dimension_numbers = #tpu.dot_dimension_numbers<[1], [0], [0], [1], [0, 0, 1, 1], [], []>} : vector<128x8xbf16>, vector<8x128xbf16>, vector<128x128xf32> -> vector<128x128xf32>
    %7 = vector.broadcast %2 : vector<128x1xf32> to vector<128x128xf32>
    %8 = arith.addf %6, %7 : vector<128x128xf32>
    %cst_7 = arith.constant 0.000000e+00 : f32
    %9 = vector.broadcast %cst_7 : f32 to vector<128x128xf32>
    %10 = arith.maximumf %8, %9 : vector<128x128xf32>
    %c0_8 = arith.constant 0 : index
    %c0_9 = arith.constant 0 : index
    %11 = vector.load %arg4[%c0_8, %c0_9] : memref<128x128xbf16, #tpu.memory_space<vmem>>, vector<128x128xbf16>
    %12 = arith.truncf %10 : vector<128x128xf32> to vector<128x128xbf16>
    %cst_10 = arith.constant dense<0.000000e+00> : vector<128x128xf32>
    %13 = tpu.matmul %11, %12, %cst_10 {dimension_numbers = #tpu.dot_dimension_numbers<[1], [0], [0], [1], [0, 0, 1, 1], [], []>} : vector<128x128xbf16>, vector<128x128xbf16>, vector<128x128xf32> -> vector<128x128xf32>
    %14 = vector.broadcast %3 : vector<128x1xf32> to vector<128x128xf32>
    %15 = arith.addf %13, %14 : vector<128x128xf32>
    %cst_11 = arith.constant 0.000000e+00 : f32
    %16 = vector.broadcast %cst_11 : f32 to vector<128x128xf32>
    %17 = arith.maximumf %15, %16 : vector<128x128xf32>
    %c0_12 = arith.constant 0 : index
    %c0_13 = arith.constant 0 : index
    %18 = vector.load %arg5[%c0_12, %c0_13] : memref<8x128xbf16, #tpu.memory_space<vmem>>, vector<8x128xbf16>
    %19 = arith.truncf %17 : vector<128x128xf32> to vector<128x128xbf16>
    %cst_14 = arith.constant dense<0.000000e+00> : vector<8x128xf32>
    %20 = tpu.matmul %18, %19, %cst_14 {dimension_numbers = #tpu.dot_dimension_numbers<[1], [0], [0], [1], [0, 0, 1, 1], [], []>} : vector<8x128xbf16>, vector<128x128xbf16>, vector<8x128xf32> -> vector<8x128xf32>
    %21 = vector.broadcast %4 : vector<8x1xf32> to vector<8x128xf32>
    %22 = arith.addf %20, %21 : vector<8x128xf32>
    %23 = vector.extract_strided_slice %22 {offsets = [0, 0], sizes = [2, 128], strides = [1, 1]} : vector<8x128xf32> to vector<2x128xf32>
    %c0_15 = arith.constant 0 : index
    %c0_16 = arith.constant 0 : index
    %24 = vector.load %arg6[%c0_15, %c0_16] : memref<2x128xf32, #tpu.memory_space<vmem>>, vector<2x128xf32>
    tpu.vector_store %arg6[%c0_15, %c0_16], %23 {strides = array<i32>} : memref<2x128xf32, #tpu.memory_space<vmem>>, vector<2x128xf32>,
    return
  }
  func.func @transform_0(%arg0: i32) -> (i32, i32) {
    %c0_i32 = arith.constant 0 : i32
    %c0_i32_0 = arith.constant 0 : i32
    return %c0_i32, %arg0 : i32, i32
  }
  func.func @transform_1(%arg0: i32) -> (i32, i32) {
    %c0_i32 = arith.constant 0 : i32
    %c0_i32_0 = arith.constant 0 : i32
    %c0_i32_1 = arith.constant 0 : i32
    return %c0_i32, %c0_i32_0 : i32, i32
  }
  func.func @transform_2(%arg0: i32) -> (i32, i32) {
    %c0_i32 = arith.constant 0 : i32
    %c0_i32_0 = arith.constant 0 : i32
    %c0_i32_1 = arith.constant 0 : i32
    return %c0_i32, %c0_i32_0 : i32, i32
  }
  func.func @transform_3(%arg0: i32) -> (i32, i32) {
    %c0_i32 = arith.constant 0 : i32
    %c0_i32_0 = arith.constant 0 : i32
    %c0_i32_1 = arith.constant 0 : i32
    return %c0_i32, %c0_i32_0 : i32, i32
  }
  func.func @transform_4(%arg0: i32) -> (i32, i32) {
    %c0_i32 = arith.constant 0 : i32
    %c0_i32_0 = arith.constant 0 : i32
    %c0_i32_1 = arith.constant 0 : i32
    return %c0_i32, %c0_i32_0 : i32, i32
  }
  func.func @transform_5(%arg0: i32) -> (i32, i32) {
    %c0_i32 = arith.constant 0 : i32
    %c0_i32_0 = arith.constant 0 : i32
    return %c0_i32, %arg0 : i32, i32
  }
}

</mosaic_0001>

<llo_original>
// kernel: tpu_custom_call.1
$region0: #{tpu_custom_call.1}
  #allocation0 [shape = 'u32[]', space=smem, size = 0x4, offset = 0x4, fixed_abs, tag = 'smem constant byte address 0x4 - core index']
  #allocation1 [shape = 'u32[72,128]{1,0:T(1,128)}', space=vmem, size = 0x9000, scoped, tag = 'internal scratch']
  %s0 = inlined_call_operand.vmem [shape: f32[8,128], index: 0, kind: input, shape index: {}]
  %s1 = inlined_call_operand.vmem [shape: bf16[128,8], index: 1, kind: input, shape index: {}]
  %s2 = inlined_call_operand.vmem [shape: f32[128,8], index: 2, kind: input, shape index: {}]
  %s3 = inlined_call_operand.vmem [shape: bf16[128,128], index: 3, kind: input, shape index: {}]
  %s4 = inlined_call_operand.vmem [shape: bf16[8,128], index: 4, kind: input, shape index: {}]
  %s5 = inlined_call_operand.hbm [shape: f32[2,128], index: 5, kind: output, shape index: {}]
  %s6 = sld [smem:[#allocation0]]
  $region30: #{tpu_custom_call.1} parent=0
    _
  %s8 = ssub.s32 1, %s6
  %s9 = scalar_select 0, %s8, %s6
  $region1: #{tpu_custom_call.1} parent=0
    #allocation2 [shape = 'u8[1024]{0}', space=vmem, size = 0x400, scoped, tag = 'output window, operand 0, single buffered']
    #allocation3 [shape = 's32[1]{0}', space=sflag, size = 0x4, scoped, tag = 'scoped memory for tpu_custom_call.1']
    %10 = vsyncpa [#allocation3], 0
    // Predicated region
    $region2: #{tpu_custom_call.1} parent=1 // pred_check
      _
    $region3: #{tpu_custom_call.1} parent=1 // pred_check_branch
      %12 = sbr.rel (0) target = $region5
    $region4: #{tpu_custom_call.1} parent=1 // pred_region
      _
    $region5: #{tpu_custom_call.1} parent=1 // pred_fallthru
      _
    // Predicated region
    $region6: #{tpu_custom_call.1} parent=1 // pred_check
      _
    $region7: #{tpu_custom_call.1} parent=1 // pred_check_branch
      %14 = sbr.rel (0) target = $region9
    $region8: #{tpu_custom_call.1} parent=1 // pred_region
      _
    $region9: #{tpu_custom_call.1} parent=1 // pred_fallthru
      _
    // Predicated region
    $region10: #{tpu_custom_call.1} parent=1 // pred_check
      _
    $region11: #{tpu_custom_call.1} parent=1 // pred_check_branch
      %16 = sbr.rel (0) target = $region13
    $region12: #{tpu_custom_call.1} parent=1 // pred_region
      _
    $region13: #{tpu_custom_call.1} parent=1 // pred_fallthru
      _
    // Predicated region
    $region14: #{tpu_custom_call.1} parent=1 // pred_check
      _
    $region15: #{tpu_custom_call.1} parent=1 // pred_check_branch
      %18 = sbr.rel (0) target = $region17
    $region16: #{tpu_custom_call.1} parent=1 // pred_region
      _
    $region17: #{tpu_custom_call.1} parent=1 // pred_fallthru
      _
    // Predicated region
    $region18: #{tpu_custom_call.1} parent=1 // pred_check
      _
    $region19: #{tpu_custom_call.1} parent=1 // pred_check_branch
      %20 = sbr.rel (0) target = $region21
    $region20: #{tpu_custom_call.1} parent=1 // pred_region
      _
    $region21: #{tpu_custom_call.1} parent=1 // pred_fallthru
      _
    %v22 = vld [vmem:[%s0] sm:$0xff]
    %v23 = vpack.c.bf16 %v22, %v22
    %v24 = vld [vmem:[%s2] sm:$0xff]
    %v25 = vld [vmem:[%s2 + $0x8] sm:$0xff]
    %v26 = vld [vmem:[%s2 + $0x10] sm:$0xff]
    %v27 = vld [vmem:[%s2 + $0x18] sm:$0xff]
    %v28 = vld [vmem:[%s2 + $0x20] sm:$0xff]
    %v29 = vld [vmem:[%s2 + $0x28] sm:$0xff]
    %v30 = vld [vmem:[%s2 + $0x30] sm:$0xff]
    %v31 = vld [vmem:[%s2 + $0x38] sm:$0xff]
    %v32 = vld [vmem:[%s2 + $0x40] sm:$0xff]
    %v33 = vld [vmem:[%s2 + $0x48] sm:$0xff]
    %v34 = vld [vmem:[%s2 + $0x50] sm:$0xff]
    %v35 = vld [vmem:[%s2 + $0x58] sm:$0xff]
    %v36 = vld [vmem:[%s2 + $0x60] sm:$0xff]
    %v37 = vld [vmem:[%s2 + $0x68] sm:$0xff]
    %v38 = vld [vmem:[%s2 + $0x70] sm:$0xff]
    %v39 = vld [vmem:[%s2 + $0x78] sm:$0xff]
    %v40 = vld [vmem:[%s1] sm:$0xf]
    %v41 = vld [vmem:[%s1 + $0x4] sm:$0xf]
    %v42 = vld [vmem:[%s1 + $0x8] sm:$0xf]
    %v43 = vld [vmem:[%s1 + $0xc] sm:$0xf]
    %v44 = vld [vmem:[%s1 + $0x10] sm:$0xf]
    %v45 = vld [vmem:[%s1 + $0x14] sm:$0xf]
    %v46 = vld [vmem:[%s1 + $0x18] sm:$0xf]
    %v47 = vld [vmem:[%s1 + $0x1c] sm:$0xf]
    %v48 = vld [vmem:[%s1 + $0x20] sm:$0xf]
    %v49 = vld [vmem:[%s1 + $0x24] sm:$0xf]
    %v50 = vld [vmem:[%s1 + $0x28] sm:$0xf]
    %v51 = vld [vmem:[%s1 + $0x2c] sm:$0xf]
    %v52 = vld [vmem:[%s1 + $0x30] sm:$0xf]
    %v53 = vld [vmem:[%s1 + $0x34] sm:$0xf]
    %v54 = vld [vmem:[%s1 + $0x38] sm:$0xf]
    %v55 = vld [vmem:[%s1 + $0x3c] sm:$0xf]
    %57 = vset.pattern.permute.xlu0 0
    %58 = vperm.xlu0 %57, %v24
    %v59 = vpop.permute.xlu0 %58
    %62 = vset.pattern.permute.xlu0 0
    %63 = vperm.xlu0 %62, %v25
    %v64 = vpop.permute.xlu0 %63
    %67 = vset.pattern.permute.xlu0 0
    %68 = vperm.xlu0 %67, %v26
    %v69 = vpop.permute.xlu0 %68
    %72 = vset.pattern.permute.xlu0 0
    %73 = vperm.xlu0 %72, %v27
    %v74 = vpop.permute.xlu0 %73
    %77 = vset.pattern.permute.xlu0 0
    %78 = vperm.xlu0 %77, %v28
    %v79 = vpop.permute.xlu0 %78
    %82 = vset.pattern.permute.xlu0 0
    %83 = vperm.xlu0 %82, %v29
    %v84 = vpop.permute.xlu0 %83
    %87 = vset.pattern.permute.xlu0 0
    %88 = vperm.xlu0 %87, %v30
    %v89 = vpop.permute.xlu0 %88
    %92 = vset.pattern.permute.xlu0 0
    %93 = vperm.xlu0 %92, %v31
    %v94 = vpop.permute.xlu0 %93
    %97 = vset.pattern.permute.xlu0 0
    %98 = vperm.xlu0 %97, %v32
    %v99 = vpop.permute.xlu0 %98
    %102 = vset.pattern.permute.xlu0 0
    %103 = vperm.xlu0 %102, %v33
    %v104 = vpop.permute.xlu0 %103
    %107 = vset.pattern.permute.xlu0 0
    %108 = vperm.xlu0 %107, %v34
    %v109 = vpop.permute.xlu0 %108
    %112 = vset.pattern.permute.xlu0 0
    %113 = vperm.xlu0 %112, %v35
    %v114 = vpop.permute.xlu0 %113
    %117 = vset.pattern.permute.xlu0 0
    %118 = vperm.xlu0 %117, %v36
    %v119 = vpop.permute.xlu0 %118
    %122 = vset.pattern.permute.xlu0 0
    %123 = vperm.xlu0 %122, %v37
    %v124 = vpop.permute.xlu0 %123
    %127 = vset.pattern.permute.xlu0 0
    %128 = vperm.xlu0 %127, %v38
    %v129 = vpop.permute.xlu0 %128
    %132 = vset.pattern.permute.xlu0 0
    %133 = vperm.xlu0 %132, %v39
    %v134 = vpop.permute.xlu0 %133
    %v152 = vunpack.c.l.b16 %v40
    %v153 = vunpack.c.l.b16 %v41
    %v154 = vunpack.c.l.b16 %v42
    %v155 = vunpack.c.l.b16 %v43
    %v156 = vunpack.c.l.b16 %v44
    %v157 = vunpack.c.l.b16 %v45
    %v158 = vunpack.c.l.b16 %v46
    %v159 = vunpack.c.l.b16 %v47
    %v160 = vunpack.c.l.b16 %v48
    %v161 = vunpack.c.l.b16 %v49
    %v162 = vunpack.c.l.b16 %v50
    %v163 = vunpack.c.l.b16 %v51
    %v164 = vunpack.c.l.b16 %v52
    %v165 = vunpack.c.l.b16 %v53
    %v166 = vunpack.c.l.b16 %v54
    %v167 = vunpack.c.l.b16 %v55
    %v168 = vpack.c.b16 %v153, %v152
    %v169 = vpack.c.b16 %v155, %v154
    %v170 = vpack.c.b16 %v157, %v156
    %v171 = vpack.c.b16 %v159, %v158
    %v172 = vpack.c.b16 %v161, %v160
    %v173 = vpack.c.b16 %v163, %v162
    %v174 = vpack.c.b16 %v165, %v164
    %v175 = vpack.c.b16 %v167, %v166
    %vm176 = vcmask 64512
    %v178 = vsel %vm176, %v168, 0
    %v181 = vsel %vm176, %v169, 0
    %v184 = vsel %vm176, %v170, 0
    %v187 = vsel %vm176, %v171, 0
    %v190 = vsel %vm176, %v172, 0
    %v193 = vsel %vm176, %v173, 0
    %v196 = vsel %vm176, %v174, 0
    %v199 = vsel %vm176, %v175, 0
    %vm201 = vcmask 1043456
    %v203 = vsel %vm201, %v23, 0
    %205 = vmatpush.bf16.msra.mxu0 0
    %206 = vmatpush.bf16.msra.mxu0 0
    %207 = vmatpush.bf16.msra.mxu0 0
    %208 = vmatpush.bf16.msra.mxu0 0
    %209 = vmatpush.bf16.msra.mxu0 0
    %210 = vmatpush.bf16.msra.mxu0 0
    %211 = vmatpush.bf16.msra.mxu0 0
    %212 = vmatpush.bf16.msra.mxu0 %v203
    %213 = vmatmul.bf16.gmra.mxu0 %v178
    %v214 = vpop.f32.mrf.mxu0
    %v215 = vadd.f32 %v59, %v214
    %v216 = vpop.f32.mrf.mxu0
    %v217 = vadd.f32 %v64, %v216
    %218 = vmatmul.bf16.gmra.mxu0 %v181
    %v219 = vpop.f32.mrf.mxu0
    %v220 = vadd.f32 %v69, %v219
    %v221 = vpop.f32.mrf.mxu0
    %v222 = vadd.f32 %v74, %v221
    %223 = vmatmul.bf16.gmra.mxu0 %v184
    %v224 = vpop.f32.mrf.mxu0
    %v225 = vadd.f32 %v79, %v224
    %v226 = vpop.f32.mrf.mxu0
    %v227 = vadd.f32 %v84, %v226
    %228 = vmatmul.bf16.gmra.mxu0 %v187
    %v229 = vpop.f32.mrf.mxu0
    %v230 = vadd.f32 %v89, %v229
    %v231 = vpop.f32.mrf.mxu0
    %v232 = vadd.f32 %v94, %v231
    %233 = vmatmul.bf16.gmra.mxu0 %v190
    %v234 = vpop.f32.mrf.mxu0
    %v235 = vadd.f32 %v99, %v234
    %v236 = vpop.f32.mrf.mxu0
    %v237 = vadd.f32 %v104, %v236
    %238 = vmatmul.bf16.gmra.mxu0 %v193
    %v239 = vpop.f32.mrf.mxu0
    %v240 = vadd.f32 %v109, %v239
    %v241 = vpop.f32.mrf.mxu0
    %v242 = vadd.f32 %v114, %v241
    %243 = vmatmul.bf16.gmra.mxu0 %v196
    %v244 = vpop.f32.mrf.mxu0
    %v245 = vadd.f32 %v119, %v244
    %v246 = vpop.f32.mrf.mxu0
    %v247 = vadd.f32 %v124, %v246
    %248 = vmatmul.bf16.gmra.mxu0 %v199
    %v249 = vpop.f32.mrf.mxu0
    %v250 = vadd.f32 %v129, %v249
    %v251 = vpop.f32.mrf.mxu0
    %v252 = vadd.f32 %v134, %v251
    %253 = vdwg.mxu0
    %v254 = vmax.f32 %v215, 0.0
    %v255 = vmax.f32 %v217, 0.0
    %v256 = vmax.f32 %v220, 0.0
    %v257 = vmax.f32 %v222, 0.0
    %v258 = vmax.f32 %v225, 0.0
    %v259 = vmax.f32 %v227, 0.0
    %v260 = vmax.f32 %v230, 0.0
    %v261 = vmax.f32 %v232, 0.0
    %v262 = vmax.f32 %v235, 0.0
    %v263 = vmax.f32 %v237, 0.0
    %v264 = vmax.f32 %v240, 0.0
    %v265 = vmax.f32 %v242, 0.0
    %v266 = vmax.f32 %v245, 0.0
    %v267 = vmax.f32 %v247, 0.0
    %v268 = vmax.f32 %v250, 0.0
    %v269 = vmax.f32 %v252, 0.0
    %v270 = vld [vmem:[%s3] sm:$0xf]
    %v271 = vld [vmem:[%s3 + $0x4] sm:$0xf]
    %v272 = vld [vmem:[%s3 + $0x8] sm:$0xf]
    %v273 = vld [vmem:[%s3 + $0xc] sm:$0xf]
    %v274 = vld [vmem:[%s3 + $0x10] sm:$0xf]
    %v275 = vld [vmem:[%s3 + $0x14] sm:$0xf]
    %v276 = vld [vmem:[%s3 + $0x18] sm:$0xf]
    %v277 = vld [vmem:[%s3 + $0x1c] sm:$0xf]
    %v278 = vld [vmem:[%s3 + $0x20] sm:$0xf]
    %v279 = vld [vmem:[%s3 + $0x24] sm:$0xf]
    %v280 = vld [vmem:[%s3 + $0x28] sm:$0xf]
    %v281 = vld [vmem:[%s3 + $0x2c] sm:$0xf]
    %v282 = vld [vmem:[%s3 + $0x30] sm:$0xf]
    %v283 = vld [vmem:[%s3 + $0x34] sm:$0xf]
    %v284 = vld [vmem:[%s3 + $0x38] sm:$0xf]
    %v285 = vld [vmem:[%s3 + $0x3c] sm:$0xf]
    %v286 = vpack.c.bf16 %v255, %v254
    %v287 = vpack.c.bf16 %v257, %v256
    %v288 = vpack.c.bf16 %v259, %v258
    %v289 = vpack.c.bf16 %v261, %v260
    %v290 = vpack.c.bf16 %v263, %v262
    %v291 = vpack.c.bf16 %v265, %v264
    %v292 = vpack.c.bf16 %v267, %v266
    %v293 = vpack.c.bf16 %v269, %v268
    %294 = vset.pattern.permute.xlu0 1
    %295 = vperm.xlu0 %294, %v24
    %v296 = vpop.permute.xlu0 %295
    %298 = vset.pattern.permute.xlu0 1
    %299 = vperm.xlu0 %298, %v25
    %v300 = vpop.permute.xlu0 %299
    %302 = vset.pattern.permute.xlu0 1
    %303 = vperm.xlu0 %302, %v26
    %v304 = vpop.permute.xlu0 %303
    %306 = vset.pattern.permute.xlu0 1
    %307 = vperm.xlu0 %306, %v27
    %v308 = vpop.permute.xlu0 %307
    %310 = vset.pattern.permute.xlu0 1
    %311 = vperm.xlu0 %310, %v28
    %v312 = vpop.permute.xlu0 %311
    %314 = vset.pattern.permute.xlu0 1
    %315 = vperm.xlu0 %314, %v29
    %v316 = vpop.permute.xlu0 %315
    %318 = vset.pattern.permute.xlu0 1
    %319 = vperm.xlu0 %318, %v30
    %v320 = vpop.permute.xlu0 %319
    %322 = vset.pattern.permute.xlu0 1
    %323 = vperm.xlu0 %322, %v31
    %v324 = vpop.permute.xlu0 %323
    %326 = vset.pattern.permute.xlu0 1
    %327 = vperm.xlu0 %326, %v32
    %v328 = vpop.permute.xlu0 %327
    %330 = vset.pattern.permute.xlu0 1
    %331 = vperm.xlu0 %330, %v33
    %v332 = vpop.permute.xlu0 %331
    %334 = vset.pattern.permute.xlu0 1
    %335 = vperm.xlu0 %334, %v34
    %v336 = vpop.permute.xlu0 %335
    %338 = vset.pattern.permute.xlu0 1
    %339 = vperm.xlu0 %338, %v35
    %v340 = vpop.permute.xlu0 %339
    %342 = vset.pattern.permute.xlu0 1
    %343 = vperm.xlu0 %342, %v36
    %v344 = vpop.permute.xlu0 %343
    %346 = vset.pattern.permute.xlu0 1
    %347 = vperm.xlu0 %346, %v37
    %v348 = vpop.permute.xlu0 %347
    %350 = vset.pattern.permute.xlu0 1
    %351 = vperm.xlu0 %350, %v38
    %v352 = vpop.permute.xlu0 %351
    %354 = vset.pattern.permute.xlu0 1
    %355 = vperm.xlu0 %354, %v39
    %v356 = vpop.permute.xlu0 %355
    %v374 = vunpack.c.l.b16 %v270
    %v375 = vunpack.c.l.b16 %v271
    %v376 = vunpack.c.l.b16 %v272
    %v377 = vunpack.c.l.b16 %v273
    %v378 = vunpack.c.l.b16 %v274
    %v379 = vunpack.c.l.b16 %v275
    %v380 = vunpack.c.l.b16 %v276
    %v381 = vunpack.c.l.b16 %v277
    %v382 = vunpack.c.l.b16 %v278
    %v383 = vunpack.c.l.b16 %v279
    %v384 = vunpack.c.l.b16 %v280
    %v385 = vunpack.c.l.b16 %v281
    %v386 = vunpack.c.l.b16 %v282
    %v387 = vunpack.c.l.b16 %v283
    %v388 = vunpack.c.l.b16 %v284
    %v389 = vunpack.c.l.b16 %v285
    %v390 = vpack.c.b16 %v375, %v374
    %v391 = vpack.c.b16 %v377, %v376
    %v392 = vpack.c.b16 %v379, %v378
    %v393 = vpack.c.b16 %v381, %v380
    %v394 = vpack.c.b16 %v383, %v382
    %v395 = vpack.c.b16 %v385, %v384
    %v396 = vpack.c.b16 %v387, %v386
    %v397 = vpack.c.b16 %v389, %v388
    %406 = vmatpush.bf16.msra.mxu0 %v293
    %407 = vmatpush.bf16.msra.mxu0 %v292
    %408 = vmatpush.bf16.msra.mxu0 %v291
    %409 = vmatpush.bf16.msra.mxu0 %v290
    %410 = vmatpush.bf16.msra.mxu0 %v289
    %411 = vmatpush.bf16.msra.mxu0 %v288
    %412 = vmatpush.bf16.msra.mxu0 %v287
    %413 = vmatpush.bf16.msra.mxu0 %v286
    %414 = vmatmul.bf16.gmra.mxu0 %v390
    %v415 = vpop.f32.mrf.mxu0
    %v416 = vadd.f32 %v296, %v415
    %v417 = vpop.f32.mrf.mxu0
    %v418 = vadd.f32 %v300, %v417
    %419 = vmatmul.bf16.gmra.mxu0 %v391
    %v420 = vpop.f32.mrf.mxu0
    %v421 = vadd.f32 %v304, %v420
    %v422 = vpop.f32.mrf.mxu0
    %v423 = vadd.f32 %v308, %v422
    %424 = vmatmul.bf16.gmra.mxu0 %v392
    %v425 = vpop.f32.mrf.mxu0
    %v426 = vadd.f32 %v312, %v425
    %v427 = vpop.f32.mrf.mxu0
    %v428 = vadd.f32 %v316, %v427
    %429 = vmatmul.bf16.gmra.mxu0 %v393
    %v430 = vpop.f32.mrf.mxu0
    %v431 = vadd.f32 %v320, %v430
    %v432 = vpop.f32.mrf.mxu0
    %v433 = vadd.f32 %v324, %v432
    %434 = vmatmul.bf16.gmra.mxu0 %v394
    %v435 = vpop.f32.mrf.mxu0
    %v436 = vadd.f32 %v328, %v435
    %v437 = vpop.f32.mrf.mxu0
    %v438 = vadd.f32 %v332, %v437
    %439 = vmatmul.bf16.gmra.mxu0 %v395
    %v440 = vpop.f32.mrf.mxu0
    %v441 = vadd.f32 %v336, %v440
    %v442 = vpop.f32.mrf.mxu0
    %v443 = vadd.f32 %v340, %v442
    %444 = vmatmul.bf16.gmra.mxu0 %v396
    %v445 = vpop.f32.mrf.mxu0
    %v446 = vadd.f32 %v344, %v445
    %v447 = vpop.f32.mrf.mxu0
    %v448 = vadd.f32 %v348, %v447
    %449 = vmatmul.bf16.gmra.mxu0 %v397
    %v450 = vpop.f32.mrf.mxu0
    %v451 = vadd.f32 %v352, %v450
    %v452 = vpop.f32.mrf.mxu0
    %v453 = vadd.f32 %v356, %v452
    %454 = vdwg.mxu0
    %v455 = vmax.f32 %v416, 0.0
    %v456 = vmax.f32 %v418, 0.0
    %v457 = vmax.f32 %v421, 0.0
    %v458 = vmax.f32 %v423, 0.0
    %v459 = vmax.f32 %v426, 0.0
    %v460 = vmax.f32 %v428, 0.0
    %v461 = vmax.f32 %v431, 0.0
    %v462 = vmax.f32 %v433, 0.0
    %v463 = vmax.f32 %v436, 0.0
    %v464 = vmax.f32 %v438, 0.0
    %v465 = vmax.f32 %v441, 0.0
    %v466 = vmax.f32 %v443, 0.0
    %v467 = vmax.f32 %v446, 0.0
    %v468 = vmax.f32 %v448, 0.0
    %v469 = vmax.f32 %v451, 0.0
    %v470 = vmax.f32 %v453, 0.0
    %v471 = vld [vmem:[%s4] sm:$0xf]
    %v472 = vpack.c.bf16 %v456, %v455
    %v473 = vpack.c.bf16 %v458, %v457
    %v474 = vpack.c.bf16 %v460, %v459
    %v475 = vpack.c.bf16 %v462, %v461
    %v476 = vpack.c.bf16 %v464, %v463
    %v477 = vpack.c.bf16 %v466, %v465
    %v478 = vpack.c.bf16 %v468, %v467
    %v479 = vpack.c.bf16 %v470, %v469
    %480 = vset.pattern.permute.xlu0 2
    %481 = vperm.xlu0 %480, %v24
    %v482 = vpop.permute.xlu0 %481
    %484 = vmatpush.bf16.msra.mxu0 %v479
    %485 = vmatpush.bf16.msra.mxu0 %v478
    %486 = vmatpush.bf16.msra.mxu0 %v477
    %487 = vmatpush.bf16.msra.mxu0 %v476
    %488 = vmatpush.bf16.msra.mxu0 %v475
    %489 = vmatpush.bf16.msra.mxu0 %v474
    %490 = vmatpush.bf16.msra.mxu0 %v473
    %491 = vmatpush.bf16.msra.mxu0 %v472
    %492 = vmatmul.bf16.gmra.mxu0 %v471
    %v493 = vpop.f32.mrf.mxu0
    %v494 = vadd.f32 %v482, %v493
    %v495 = vpop.f32.mrf.mxu0
    %496 = vdwg.mxu0
    %497 = vst [vmem:[#allocation2] sm:$0x3] %v494
    // Predicated region
    $region22: #{tpu_custom_call.1} parent=1 // pred_check
      _
    $region23: #{tpu_custom_call.1} parent=1 // pred_check_branch
      %499 = sbr.rel (0) target = $region25
    $region24: #{tpu_custom_call.1} parent=1 // pred_region
      %501 = vsyncadd [#allocation3], 0
      %s503 = sshll.u32 [#allocation2], 4
      %s504 = int_to_ptr.vmem [resolvable:$true] %s503
      %s505 = sshll.u32 %s5, 4
      %s506 = int_to_ptr.hbm [resolvable:$true] %s505
      %508 = dma.vmem_to_hbm [thread:$0]  %s504, 32, %s506, [#allocation3]
    $region25: #{tpu_custom_call.1} parent=1 // pred_fallthru
      _
    // Predicated region
    $region26: #{tpu_custom_call.1} parent=1 // pred_check
      _
    $region27: #{tpu_custom_call.1} parent=1 // pred_check_branch
      %510 = sbr.rel (0) target = $region29
    $region28: #{tpu_custom_call.1} parent=1 // pred_region
      %512 = dma.done [#allocation3], 32
    $region29: #{tpu_custom_call.1} parent=1 // pred_fallthru
      _
    %513 = vsyncpa [#allocation3], 1

</llo_original>
